<compile_context>
chip_gen: v6e
topology: v6e:2x2x1
jax: 0.10.0
libtpu: 0.0.40
codegen_flags: <defaults>
</compile_context>

<pallas_src>
import functools

import numpy as np
import jax
import jax.numpy as jnp
from jax.experimental import pallas as pl
from jax.experimental.pallas import tpu as pltpu

OUT_W = 128  # lane-dense output width (3J=36 / 4J=48 padded up to one lane group)


# ----------------------------------------------------------------------------
# Pallas kernel
# ----------------------------------------------------------------------------
def kinematic_kernel(x_ref, off_ref,
                     w1_ref, b1_ref, w2_ref, b2_ref,
                     w3_ref, b3_ref, w4_ref, b4_ref,
                     mrot_ref, mfk_ref,
                     joints_ref, rot_ref, *, num_joints):
    J = num_joints
    x = x_ref[...]

    # encoder / decoder MLP: 4 matmuls + ReLU (MXU)
    h = jnp.maximum(
        jnp.dot(x, w1_ref[...], preferred_element_type=jnp.float32) + b1_ref[...], 0.0)
    h = jnp.maximum(
        jnp.dot(h, w2_ref[...], preferred_element_type=jnp.float32) + b2_ref[...], 0.0)
    h = jnp.maximum(
        jnp.dot(h, w3_ref[...], preferred_element_type=jnp.float32) + b3_ref[...], 0.0)
    # decoder output is component-major: [qw_0..qw_J | qx_* | qy_* | qz_*]
    r = jnp.dot(h, w4_ref[...], preferred_element_type=jnp.float32) + b4_ref[...]  # [TB, 4J]

    # ---- vectorized quaternion normalization (contiguous [TB, J] lane slices) ----
    rw = r[:, 0 * J:1 * J]
    rx_ = r[:, 1 * J:2 * J]
    ry_ = r[:, 2 * J:3 * J]
    rz_ = r[:, 3 * J:4 * J]
    sumsq = rw * rw + rx_ * rx_ + ry_ * ry_ + rz_ * rz_
    inv = 1.0 / (jnp.sqrt(sumsq) + 1e-8)          # same epsilon semantics as reference
    qw = rw * inv
    qx = rx_ * inv
    qy = ry_ * inv
    qz = rz_ * inv

    # re-interleave to [B, J*4] (padded to OUT_W lanes) with one tiny MXU matmul
    q_cm = jnp.concatenate([qw, qx, qy, qz], axis=1)                       # [TB, 4J]
    rot_ref[...] = jnp.dot(q_cm, mrot_ref[...], preferred_element_type=jnp.float32)

    # ---- vectorized quaternion-rotate of all bone offsets (lane-parallel) ----
    ox = off_ref[0:1, :]          # [1, J] broadcasts over the batch sublanes
    oy = off_ref[1:2, :]
    oz = off_ref[2:3, :]
    r00 = 1.0 - 2.0 * (qy * qy + qz * qz)
    r01 = 2.0 * (qx * qy - qz * qw)
    r02 = 2.0 * (qx * qz + qy * qw)
    r10 = 2.0 * (qx * qy + qz * qw)
    r11 = 1.0 - 2.0 * (qx * qx + qz * qz)
    r12 = 2.0 * (qy * qz - qx * qw)
    r20 = 2.0 * (qx * qz - qy * qw)
    r21 = 2.0 * (qy * qz + qx * qw)
    r22 = 1.0 - 2.0 * (qx * qx + qy * qy)
    rx = r00 * ox + r01 * oy + r02 * oz
    ry = r10 * ox + r11 * oy + r12 * oz
    rz = r20 * ox + r21 * oy + r22 * oz
    rotated_cm = jnp.concatenate([rx, ry, rz], axis=1)                     # [TB, 3J]

    # FK ancestor accumulation + interleave to [B, J*3] folded into one matmul
    joints_ref[...] = jnp.dot(rotated_cm, mfk_ref[...],
                              preferred_element_type=jnp.float32)


# ----------------------------------------------------------------------------
# Constant-matrix construction (done once, on host)
# ----------------------------------------------------------------------------
def _build_constant_matrices(parent_indices):
    J = len(parent_indices)
    # ancestor mask A[k, j] = 1 iff k lies on the chain root..j (inclusive of j).
    # Built by walking each joint's chain, so it does NOT require parent_indices
    # to be topologically ordered (fixes the correctness concern of the unroll).
    A = np.zeros((J, J), np.float32)
    for j in range(J):
        k = j
        while k != -1:
            A[k, j] = 1.0
            k = parent_indices[k]
    # component-major rotated offsets [x_*|y_*|z_*] -> interleaved joints, padded
    M_fk = np.zeros((3 * J, OUT_W), np.float32)
    for c in range(3):
        for k in range(J):
            for j in range(J):
                M_fk[c * J + k, 3 * j + c] = A[k, j]
    # component-major quats [w_*|x_*|y_*|z_*] -> interleaved [B, J*4], padded
    M_rot = np.zeros((4 * J, OUT_W), np.float32)
    for c in range(4):
        for j in range(J):
            M_rot[c * J + j, 4 * j + c] = 1.0
    return jnp.asarray(M_fk), jnp.asarray(M_rot)


# ----------------------------------------------------------------------------
# Wrapper
# ----------------------------------------------------------------------------
def kinematic_net(x, params, offsets, parent_indices):
    """x: [B, D_in] float32. Returns (joints_3d [B, J, 3], rot [B, J, 4])."""
    B, D_in = x.shape
    J = len(parent_indices)
    w1, b1, w2, b2, w3, b3, w4, b4 = params
    H = w1.shape[1]

    # weight-side column permutation -> component-major decoder output (free at runtime)
    perm = np.asarray([4 * j + c for c in range(4) for j in range(J)], np.int32)
    w4cm = w4[:, perm]
    b4cm = b4[:, perm]

    offsets_cm = offsets.T                        # [3, J]: rows = x/y/z component
    M_fk, M_rot = _build_constant_matrices(parent_indices)

    # batch padding / tiling: sublane multiple of 8, parallel grid over batch tiles
    if B <= 128:
        TB = max(8, -(-B // 8) * 8)
        Bp = TB
    else:
        TB = 128                                  # modest tile -> fits v7x's smaller VMEM
        Bp = -(-B // 128) * 128
    xp = jnp.pad(x, ((0, Bp - B), (0, 0))) if Bp != B else x
    grid = (Bp // TB,)

    const = lambda i: (0, 0)
    kernel = functools.partial(kinematic_kernel, num_joints=J)
    joints_pad, rot_pad = pl.pallas_call(
        kernel,
        grid=grid,
        out_shape=(jax.ShapeDtypeStruct((Bp, OUT_W), jnp.float32),
                   jax.ShapeDtypeStruct((Bp, OUT_W), jnp.float32)),
        in_specs=[
            pl.BlockSpec((TB, D_in), lambda i: (i, 0)),        # x
            pl.BlockSpec((3, J), const),                       # bone offsets (comp.-major)
            pl.BlockSpec((D_in, H), const), pl.BlockSpec((1, H), const),
            pl.BlockSpec((H, H), const),    pl.BlockSpec((1, H), const),
            pl.BlockSpec((H, H), const),    pl.BlockSpec((1, H), const),
            pl.BlockSpec((H, 4 * J), const), pl.BlockSpec((1, 4 * J), const),
            pl.BlockSpec((4 * J, OUT_W), const),               # M_rot
            pl.BlockSpec((3 * J, OUT_W), const),               # M_fk
        ],
        out_specs=(pl.BlockSpec((TB, OUT_W), lambda i: (i, 0)),
                   pl.BlockSpec((TB, OUT_W), lambda i: (i, 0))),
        compiler_params=pltpu.CompilerParams(
            dimension_semantics=("parallel",)),   # shard batch tiles across TCs (v7x)
    )(xp, offsets_cm, w1, b1, w2, b2, w3, b3, w4cm, b4cm, M_rot, M_fk)

    joints = joints_pad[:B, :3 * J].reshape(B, J, 3)
    rot = rot_pad[:B, :4 * J].reshape(B, J, 4)
    return joints, rot


# ----------------------------------------------------------------------------
# Pure-JAX reference (mirrors the PyTorch forward) for correctness check
# ----------------------------------------------------------------------------
def quat_to_matrix_ref(q):
    w, x, y, z = q[:, 0], q[:, 1], q[:, 2], q[:, 3]
    R = jnp.stack([
        1 - 2 * (y ** 2 + z ** 2), 2 * (x * y - z * w), 2 * (x * z + y * w),
        2 * (x * y + z * w), 1 - 2 * (x ** 2 + z ** 2), 2 * (y * z - x * w),
        2 * (x * z - y * w), 2 * (y * z + x * w), 1 - 2 * (x ** 2 + y ** 2),
    ], axis=-1).reshape(-1, 3, 3)
    return R


def reference(x, params, skeleton, parent_indices):
    w1, b1, w2, b2, w3, b3, w4, b4 = params
    h = jnp.maximum(x @ w1 + b1, 0.0)
    h = jnp.maximum(h @ w2 + b2, 0.0)
    h = jnp.maximum(h @ w3 + b3, 0.0)
    rot = (h @ w4 + b4).reshape(x.shape[0], -1, 4)
    rot = rot / (jnp.linalg.norm(rot, axis=-1, keepdims=True) + 1e-8)
    B, J, _ = rot.shape
    joints = [None] * J
    for j in range(J):
        parent = parent_indices[j]
        if parent == -1:
            joints[j] = jnp.zeros((B, 3), jnp.float32)
        else:
            R = quat_to_matrix_ref(rot[:, j, :])
            offset = skeleton[j] - skeleton[parent]
            rotated = jnp.einsum('bij,j->bi', R, offset)
            joints[j] = joints[parent] + rotated
    return jnp.stack(joints, axis=1), rot


# ----------------------------------------------------------------------------
# Main
# ----------------------------------------------------------------------------
if __name__ == "__main__":
    B = 4
    input_shape = 36
    hidden_size = 128
    num_joints = 12
    parent_indices = [-1, 0, 1, 2, 0, 4, 5, 0, 7, 8, 7, 10]

    key = jax.random.PRNGKey(0)
    ks = jax.random.split(key, 10)

    # deterministic parameter init (weights stored as [in, out]; y = x @ W + b)
    w1 = jax.random.normal(ks[0], (input_shape, hidden_size), jnp.float32) * 0.1
    b1 = jax.random.normal(ks[1], (1, hidden_size), jnp.float32) * 0.01
    w2 = jax.random.normal(ks[2], (hidden_size, hidden_size), jnp.float32) * 0.1
    b2 = jax.random.normal(ks[3], (1, hidden_size), jnp.float32) * 0.01
    w3 = jax.random.normal(ks[4], (hidden_size, hidden_size), jnp.float32) * 0.1
    b3 = jax.random.normal(ks[5], (1, hidden_size), jnp.float32) * 0.01
    w4 = jax.random.normal(ks[6], (hidden_size, num_joints * 4), jnp.float32) * 0.1
    b4 = jax.random.normal(ks[7], (1, num_joints * 4), jnp.float32) * 0.01
    params = (w1, b1, w2, b2, w3, b3, w4, b4)

    # initial skeleton (buffer) and precomputed per-joint bone offsets
    skeleton = jax.random.normal(ks[8], (num_joints, 3), jnp.float32)
    offsets = []
    for j, p in enumerate(parent_indices):
        if p == -1:
            offsets.append(jnp.zeros((3,), jnp.float32))
        else:
            offsets.append(skeleton[j] - skeleton[p])
    offsets = jnp.stack(offsets, axis=0)  # [J, 3]

    # input
    x = jax.random.normal(ks[9], (B, input_shape), jnp.float32)

    joints_3d, rot = kinematic_net(x, params, offsets, parent_indices)
    jax.block_until_ready((joints_3d, rot))

    joints_ref, rot_ref = reference(x, params, skeleton, parent_indices)
    assert joints_3d.shape == (B, num_joints, 3)
    assert rot.shape == (B, num_joints, 4)
    assert jnp.allclose(rot, rot_ref, atol=1e-5, rtol=1e-5)
    assert jnp.allclose(joints_3d, joints_ref, atol=1e-5, rtol=1e-5)

    print("KERNEL_OK")
</pallas_src>

<mosaic_0001>
module attributes {stable_mosaic.version = 11 : i64} {
  func.func @kinematic_kernel(%arg0: i32, %arg1: memref<8x36xf32, #tpu.memory_space<vmem>>, %arg2: memref<3x12xf32, #tpu.memory_space<vmem>>, %arg3: memref<36x128xf32, #tpu.memory_space<vmem>>, %arg4: memref<1x128xf32, #tpu.memory_space<vmem>>, %arg5: memref<128x128xf32, #tpu.memory_space<vmem>>, %arg6: memref<1x128xf32, #tpu.memory_space<vmem>>, %arg7: memref<128x128xf32, #tpu.memory_space<vmem>>, %arg8: memref<1x128xf32, #tpu.memory_space<vmem>>, %arg9: memref<128x48xf32, #tpu.memory_space<vmem>>, %arg10: memref<1x48xf32, #tpu.memory_space<vmem>>, %arg11: memref<48x128xf32, #tpu.memory_space<vmem>>, %arg12: memref<36x128xf32, #tpu.memory_space<vmem>>, %arg13: memref<8x128xf32, #tpu.memory_space<vmem>>, %arg14: memref<8x128xf32, #tpu.memory_space<vmem>>) attributes {dimension_semantics = [#tpu.dimension_semantics<parallel>], iteration_bounds = array<i64: 1>, scalar_prefetch = 0 : i64, scratch_operands = 0 : i64, tpu.core_type = #tpu.core_type<tc>, window_params = [{transform_indices = @transform_0, window_bounds = array<i64: 8, 36>}, {pipeline_mode = #tpu.pipeline_mode<synchronous>, transform_indices = @transform_1, window_bounds = array<i64: 3, 12>}, {pipeline_mode = #tpu.pipeline_mode<synchronous>, transform_indices = @transform_2, window_bounds = array<i64: 36, 128>}, {pipeline_mode = #tpu.pipeline_mode<synchronous>, transform_indices = @transform_3, window_bounds = array<i64: 1, 128>}, {pipeline_mode = #tpu.pipeline_mode<synchronous>, transform_indices = @transform_4, window_bounds = array<i64: 128, 128>}, {pipeline_mode = #tpu.pipeline_mode<synchronous>, transform_indices = @transform_5, window_bounds = array<i64: 1, 128>}, {pipeline_mode = #tpu.pipeline_mode<synchronous>, transform_indices = @transform_6, window_bounds = array<i64: 128, 128>}, {pipeline_mode = #tpu.pipeline_mode<synchronous>, transform_indices = @transform_7, window_bounds = array<i64: 1, 128>}, {pipeline_mode = #tpu.pipeline_mode<synchronous>, transform_indices = @transform_8, window_bounds = array<i64: 128, 48>}, {pipeline_mode = #tpu.pipeline_mode<synchronous>, transform_indices = @transform_9, window_bounds = array<i64: 1, 48>}, {pipeline_mode = #tpu.pipeline_mode<synchronous>, transform_indices = @transform_10, window_bounds = array<i64: 48, 128>}, {pipeline_mode = #tpu.pipeline_mode<synchronous>, transform_indices = @transform_11, window_bounds = array<i64: 36, 128>}, {transform_indices = @transform_12, window_bounds = array<i64: 8, 128>}, {transform_indices = @transform_13, window_bounds = array<i64: 8, 128>}]} {
    %c0 = arith.constant 0 : index
    %c0_0 = arith.constant 0 : index
    %0 = vector.load %arg1[%c0, %c0_0] : memref<8x36xf32, #tpu.memory_space<vmem>>, vector<8x36xf32>
    %c0_1 = arith.constant 0 : index
    %c0_2 = arith.constant 0 : index
    %1 = vector.load %arg3[%c0_1, %c0_2] : memref<36x128xf32, #tpu.memory_space<vmem>>, vector<36x128xf32>
    %cst = arith.constant dense<0.000000e+00> : vector<8x128xf32>
    %2 = tpu.matmul %0, %1, %cst {dimension_numbers = #tpu.dot_dimension_numbers<[1], [0], [0], [1], [0, 0, 1, 1], [], []>} : vector<8x36xf32>, vector<36x128xf32>, vector<8x128xf32> -> vector<8x128xf32>
    %c0_3 = arith.constant 0 : index
    %c0_4 = arith.constant 0 : index
    %3 = vector.load %arg4[%c0_3, %c0_4] : memref<1x128xf32, #tpu.memory_space<vmem>>, vector<1x128xf32>
    %4 = vector.broadcast %3 : vector<1x128xf32> to vector<8x128xf32>
    %5 = arith.addf %2, %4 : vector<8x128xf32>
    %cst_5 = arith.constant 0.000000e+00 : f32
    %6 = vector.broadcast %cst_5 : f32 to vector<8x128xf32>
    %7 = arith.maximumf %5, %6 : vector<8x128xf32>
    %c0_6 = arith.constant 0 : index
    %c0_7 = arith.constant 0 : index
    %8 = vector.load %arg5[%c0_6, %c0_7] : memref<128x128xf32, #tpu.memory_space<vmem>>, vector<128x128xf32>
    %cst_8 = arith.constant dense<0.000000e+00> : vector<8x128xf32>
    %9 = tpu.matmul %7, %8, %cst_8 {dimension_numbers = #tpu.dot_dimension_numbers<[1], [0], [0], [1], [0, 0, 1, 1], [], []>} : vector<8x128xf32>, vector<128x128xf32>, vector<8x128xf32> -> vector<8x128xf32>
    %c0_9 = arith.constant 0 : index
    %c0_10 = arith.constant 0 : index
    %10 = vector.load %arg6[%c0_9, %c0_10] : memref<1x128xf32, #tpu.memory_space<vmem>>, vector<1x128xf32>
    %11 = vector.broadcast %10 : vector<1x128xf32> to vector<8x128xf32>
    %12 = arith.addf %9, %11 : vector<8x128xf32>
    %cst_11 = arith.constant 0.000000e+00 : f32
    %13 = vector.broadcast %cst_11 : f32 to vector<8x128xf32>
    %14 = arith.maximumf %12, %13 : vector<8x128xf32>
    %c0_12 = arith.constant 0 : index
    %c0_13 = arith.constant 0 : index
    %15 = vector.load %arg7[%c0_12, %c0_13] : memref<128x128xf32, #tpu.memory_space<vmem>>, vector<128x128xf32>
    %cst_14 = arith.constant dense<0.000000e+00> : vector<8x128xf32>
    %16 = tpu.matmul %14, %15, %cst_14 {dimension_numbers = #tpu.dot_dimension_numbers<[1], [0], [0], [1], [0, 0, 1, 1], [], []>} : vector<8x128xf32>, vector<128x128xf32>, vector<8x128xf32> -> vector<8x128xf32>
    %c0_15 = arith.constant 0 : index
    %c0_16 = arith.constant 0 : index
    %17 = vector.load %arg8[%c0_15, %c0_16] : memref<1x128xf32, #tpu.memory_space<vmem>>, vector<1x128xf32>
    %18 = vector.broadcast %17 : vector<1x128xf32> to vector<8x128xf32>
    %19 = arith.addf %16, %18 : vector<8x128xf32>
    %cst_17 = arith.constant 0.000000e+00 : f32
    %20 = vector.broadcast %cst_17 : f32 to vector<8x128xf32>
    %21 = arith.maximumf %19, %20 : vector<8x128xf32>
    %c0_18 = arith.constant 0 : index
    %c0_19 = arith.constant 0 : index
    %22 = vector.load %arg9[%c0_18, %c0_19] : memref<128x48xf32, #tpu.memory_space<vmem>>, vector<128x48xf32>
    %cst_20 = arith.constant dense<0.000000e+00> : vector<8x48xf32>
    %23 = tpu.matmul %21, %22, %cst_20 {dimension_numbers = #tpu.dot_dimension_numbers<[1], [0], [0], [1], [0, 0, 1, 1], [], []>} : vector<8x128xf32>, vector<128x48xf32>, vector<8x48xf32> -> vector<8x48xf32>
    %c0_21 = arith.constant 0 : index
    %c0_22 = arith.constant 0 : index
    %24 = vector.load %arg10[%c0_21, %c0_22] : memref<1x48xf32, #tpu.memory_space<vmem>>, vector<1x48xf32>
    %25 = vector.broadcast %24 : vector<1x48xf32> to vector<8x48xf32>
    %26 = arith.addf %23, %25 : vector<8x48xf32>
    %27 = vector.extract_strided_slice %26 {offsets = [0, 0], sizes = [8, 12], strides = [1, 1]} : vector<8x48xf32> to vector<8x12xf32>
    %28 = vector.extract_strided_slice %26 {offsets = [0, 12], sizes = [8, 12], strides = [1, 1]} : vector<8x48xf32> to vector<8x12xf32>
    %29 = vector.extract_strided_slice %26 {offsets = [0, 24], sizes = [8, 12], strides = [1, 1]} : vector<8x48xf32> to vector<8x12xf32>
    %30 = vector.extract_strided_slice %26 {offsets = [0, 36], sizes = [8, 12], strides = [1, 1]} : vector<8x48xf32> to vector<8x12xf32>
    %31 = arith.mulf %27, %27 : vector<8x12xf32>
    %32 = arith.mulf %28, %28 : vector<8x12xf32>
    %33 = arith.addf %31, %32 : vector<8x12xf32>
    %34 = arith.mulf %29, %29 : vector<8x12xf32>
    %35 = arith.addf %33, %34 : vector<8x12xf32>
    %36 = arith.mulf %30, %30 : vector<8x12xf32>
    %37 = arith.addf %35, %36 : vector<8x12xf32>
    %38 = math.sqrt %37 : vector<8x12xf32>
    %cst_23 = arith.constant 9.99999993E-9 : f32
    %39 = vector.broadcast %cst_23 : f32 to vector<8x12xf32>
    %40 = arith.addf %38, %39 : vector<8x12xf32>
    %cst_24 = arith.constant 1.000000e+00 : f32
    %41 = vector.broadcast %cst_24 : f32 to vector<8x12xf32>
    %42 = arith.divf %41, %40 : vector<8x12xf32>
    %43 = arith.mulf %27, %42 : vector<8x12xf32>
    %44 = arith.mulf %28, %42 : vector<8x12xf32>
    %45 = arith.mulf %29, %42 : vector<8x12xf32>
    %46 = arith.mulf %30, %42 : vector<8x12xf32>
    %47 = tpu.concatenate %43, %44, %45, %46 in 1 : vector<8x12xf32>, vector<8x12xf32>, vector<8x12xf32>, vector<8x12xf32> -> vector<8x48xf32>
    %c0_25 = arith.constant 0 : index
    %c0_26 = arith.constant 0 : index
    %48 = vector.load %arg11[%c0_25, %c0_26] : memref<48x128xf32, #tpu.memory_space<vmem>>, vector<48x128xf32>
    %cst_27 = arith.constant dense<0.000000e+00> : vector<8x128xf32>
    %49 = tpu.matmul %47, %48, %cst_27 {dimension_numbers = #tpu.dot_dimension_numbers<[1], [0], [0], [1], [0, 0, 1, 1], [], []>} : vector<8x48xf32>, vector<48x128xf32>, vector<8x128xf32> -> vector<8x128xf32>
    %c0_28 = arith.constant 0 : index
    %c0_29 = arith.constant 0 : index
    %50 = vector.load %arg14[%c0_28, %c0_29] : memref<8x128xf32, #tpu.memory_space<vmem>>, vector<8x128xf32>
    tpu.vector_store %arg14[%c0_28, %c0_29], %49 {strides = array<i32>} : memref<8x128xf32, #tpu.memory_space<vmem>>, vector<8x128xf32>,
    %c0_30 = arith.constant 0 : index
    %c0_31 = arith.constant 0 : index
    %51 = vector.load %arg2[%c0_30, %c0_31] : memref<3x12xf32, #tpu.memory_space<vmem>>, vector<1x12xf32>
    %c1 = arith.constant 1 : index
    %c0_32 = arith.constant 0 : index
    %52 = vector.load %arg2[%c1, %c0_32] : memref<3x12xf32, #tpu.memory_space<vmem>>, vector<1x12xf32>
    %c2 = arith.constant 2 : index
    %c0_33 = arith.constant 0 : index
    %53 = vector.load %arg2[%c2, %c0_33] : memref<3x12xf32, #tpu.memory_space<vmem>>, vector<1x12xf32>
    %54 = arith.mulf %45, %45 : vector<8x12xf32>
    %55 = arith.mulf %46, %46 : vector<8x12xf32>
    %56 = arith.addf %54, %55 : vector<8x12xf32>
    %cst_34 = arith.constant 2.000000e+00 : f32
    %57 = vector.broadcast %cst_34 : f32 to vector<8x12xf32>
    %58 = arith.mulf %57, %56 : vector<8x12xf32>
    %cst_35 = arith.constant 1.000000e+00 : f32
    %59 = vector.broadcast %cst_35 : f32 to vector<8x12xf32>
    %60 = arith.subf %59, %58 : vector<8x12xf32>
    %61 = arith.mulf %44, %45 : vector<8x12xf32>
    %62 = arith.mulf %46, %43 : vector<8x12xf32>
    %63 = arith.subf %61, %62 : vector<8x12xf32>
    %cst_36 = arith.constant 2.000000e+00 : f32
    %64 = vector.broadcast %cst_36 : f32 to vector<8x12xf32>
    %65 = arith.mulf %64, %63 : vector<8x12xf32>
    %66 = arith.mulf %44, %46 : vector<8x12xf32>
    %67 = arith.mulf %45, %43 : vector<8x12xf32>
    %68 = arith.addf %66, %67 : vector<8x12xf32>
    %cst_37 = arith.constant 2.000000e+00 : f32
    %69 = vector.broadcast %cst_37 : f32 to vector<8x12xf32>
    %70 = arith.mulf %69, %68 : vector<8x12xf32>
    %71 = arith.mulf %44, %45 : vector<8x12xf32>
    %72 = arith.mulf %46, %43 : vector<8x12xf32>
    %73 = arith.addf %71, %72 : vector<8x12xf32>
    %cst_38 = arith.constant 2.000000e+00 : f32
    %74 = vector.broadcast %cst_38 : f32 to vector<8x12xf32>
    %75 = arith.mulf %74, %73 : vector<8x12xf32>
    %76 = arith.mulf %44, %44 : vector<8x12xf32>
    %77 = arith.mulf %46, %46 : vector<8x12xf32>
    %78 = arith.addf %76, %77 : vector<8x12xf32>
    %cst_39 = arith.constant 2.000000e+00 : f32
    %79 = vector.broadcast %cst_39 : f32 to vector<8x12xf32>
    %80 = arith.mulf %79, %78 : vector<8x12xf32>
    %cst_40 = arith.constant 1.000000e+00 : f32
    %81 = vector.broadcast %cst_40 : f32 to vector<8x12xf32>
    %82 = arith.subf %81, %80 : vector<8x12xf32>
    %83 = arith.mulf %45, %46 : vector<8x12xf32>
    %84 = arith.mulf %44, %43 : vector<8x12xf32>
    %85 = arith.subf %83, %84 : vector<8x12xf32>
    %cst_41 = arith.constant 2.000000e+00 : f32
    %86 = vector.broadcast %cst_41 : f32 to vector<8x12xf32>
    %87 = arith.mulf %86, %85 : vector<8x12xf32>
    %88 = arith.mulf %44, %46 : vector<8x12xf32>
    %89 = arith.mulf %45, %43 : vector<8x12xf32>
    %90 = arith.subf %88, %89 : vector<8x12xf32>
    %cst_42 = arith.constant 2.000000e+00 : f32
    %91 = vector.broadcast %cst_42 : f32 to vector<8x12xf32>
    %92 = arith.mulf %91, %90 : vector<8x12xf32>
    %93 = arith.mulf %45, %46 : vector<8x12xf32>
    %94 = arith.mulf %44, %43 : vector<8x12xf32>
    %95 = arith.addf %93, %94 : vector<8x12xf32>
    %cst_43 = arith.constant 2.000000e+00 : f32
    %96 = vector.broadcast %cst_43 : f32 to vector<8x12xf32>
    %97 = arith.mulf %96, %95 : vector<8x12xf32>
    %98 = arith.mulf %44, %44 : vector<8x12xf32>
    %99 = arith.mulf %45, %45 : vector<8x12xf32>
    %100 = arith.addf %98, %99 : vector<8x12xf32>
    %cst_44 = arith.constant 2.000000e+00 : f32
    %101 = vector.broadcast %cst_44 : f32 to vector<8x12xf32>
    %102 = arith.mulf %101, %100 : vector<8x12xf32>
    %cst_45 = arith.constant 1.000000e+00 : f32
    %103 = vector.broadcast %cst_45 : f32 to vector<8x12xf32>
    %104 = arith.subf %103, %102 : vector<8x12xf32>
    %105 = vector.broadcast %51 : vector<1x12xf32> to vector<8x12xf32>
    %106 = arith.mulf %60, %105 : vector<8x12xf32>
    %107 = vector.broadcast %52 : vector<1x12xf32> to vector<8x12xf32>
    %108 = arith.mulf %65, %107 : vector<8x12xf32>
    %109 = arith.addf %106, %108 : vector<8x12xf32>
    %110 = vector.broadcast %53 : vector<1x12xf32> to vector<8x12xf32>
    %111 = arith.mulf %70, %110 : vector<8x12xf32>
    %112 = arith.addf %109, %111 : vector<8x12xf32>
    %113 = vector.broadcast %51 : vector<1x12xf32> to vector<8x12xf32>
    %114 = arith.mulf %75, %113 : vector<8x12xf32>
    %115 = vector.broadcast %52 : vector<1x12xf32> to vector<8x12xf32>
    %116 = arith.mulf %82, %115 : vector<8x12xf32>
    %117 = arith.addf %114, %116 : vector<8x12xf32>
    %118 = vector.broadcast %53 : vector<1x12xf32> to vector<8x12xf32>
    %119 = arith.mulf %87, %118 : vector<8x12xf32>
    %120 = arith.addf %117, %119 : vector<8x12xf32>
    %121 = vector.broadcast %51 : vector<1x12xf32> to vector<8x12xf32>
    %122 = arith.mulf %92, %121 : vector<8x12xf32>
    %123 = vector.broadcast %52 : vector<1x12xf32> to vector<8x12xf32>
    %124 = arith.mulf %97, %123 : vector<8x12xf32>
    %125 = arith.addf %122, %124 : vector<8x12xf32>
    %126 = vector.broadcast %53 : vector<1x12xf32> to vector<8x12xf32>
    %127 = arith.mulf %104, %126 : vector<8x12xf32>
    %128 = arith.addf %125, %127 : vector<8x12xf32>
    %129 = tpu.concatenate %112, %120, %128 in 1 : vector<8x12xf32>, vector<8x12xf32>, vector<8x12xf32> -> vector<8x36xf32>
    %c0_46 = arith.constant 0 : index
    %c0_47 = arith.constant 0 : index
    %130 = vector.load %arg12[%c0_46, %c0_47] : memref<36x128xf32, #tpu.memory_space<vmem>>, vector<36x128xf32>
    %cst_48 = arith.constant dense<0.000000e+00> : vector<8x128xf32>
    %131 = tpu.matmul %129, %130, %cst_48 {dimension_numbers = #tpu.dot_dimension_numbers<[1], [0], [0], [1], [0, 0, 1, 1], [], []>} : vector<8x36xf32>, vector<36x128xf32>, vector<8x128xf32> -> vector<8x128xf32>
    %c0_49 = arith.constant 0 : index
    %c0_50 = arith.constant 0 : index
    %132 = vector.load %arg13[%c0_49, %c0_50] : memref<8x128xf32, #tpu.memory_space<vmem>>, vector<8x128xf32>
    tpu.vector_store %arg13[%c0_49, %c0_50], %131 {strides = array<i32>} : memref<8x128xf32, #tpu.memory_space<vmem>>, vector<8x128xf32>,
    return
  }
  func.func @transform_0(%arg0: i32) -> (i32, i32) {
    %c0_i32 = arith.constant 0 : i32
    %c0_i32_0 = arith.constant 0 : i32
    return %arg0, %c0_i32 : i32, i32
  }
  func.func @transform_1(%arg0: i32) -> (i32, i32) {
    %c0_i32 = arith.constant 0 : i32
    %c0_i32_0 = arith.constant 0 : i32
    %c0_i32_1 = arith.constant 0 : i32
    return %c0_i32, %c0_i32_0 : i32, i32
  }
  func.func @transform_2(%arg0: i32) -> (i32, i32) {
    %c0_i32 = arith.constant 0 : i32
    %c0_i32_0 = arith.constant 0 : i32
    %c0_i32_1 = arith.constant 0 : i32
    return %c0_i32, %c0_i32_0 : i32, i32
  }
  func.func @transform_3(%arg0: i32) -> (i32, i32) {
    %c0_i32 = arith.constant 0 : i32
    %c0_i32_0 = arith.constant 0 : i32
    %c0_i32_1 = arith.constant 0 : i32
    return %c0_i32, %c0_i32_0 : i32, i32
  }
  func.func @transform_4(%arg0: i32) -> (i32, i32) {
    %c0_i32 = arith.constant 0 : i32
    %c0_i32_0 = arith.constant 0 : i32
    %c0_i32_1 = arith.constant 0 : i32
    return %c0_i32, %c0_i32_0 : i32, i32
  }
  func.func @transform_5(%arg0: i32) -> (i32, i32) {
    %c0_i32 = arith.constant 0 : i32
    %c0_i32_0 = arith.constant 0 : i32
    %c0_i32_1 = arith.constant 0 : i32
    return %c0_i32, %c0_i32_0 : i32, i32
  }
  func.func @transform_6(%arg0: i32) -> (i32, i32) {
    %c0_i32 = arith.constant 0 : i32
    %c0_i32_0 = arith.constant 0 : i32
    %c0_i32_1 = arith.constant 0 : i32
    return %c0_i32, %c0_i32_0 : i32, i32
  }
  func.func @transform_7(%arg0: i32) -> (i32, i32) {
    %c0_i32 = arith.constant 0 : i32
    %c0_i32_0 = arith.constant 0 : i32
    %c0_i32_1 = arith.constant 0 : i32
    return %c0_i32, %c0_i32_0 : i32, i32
  }
  func.func @transform_8(%arg0: i32) -> (i32, i32) {
    %c0_i32 = arith.constant 0 : i32
    %c0_i32_0 = arith.constant 0 : i32
    %c0_i32_1 = arith.constant 0 : i32
    return %c0_i32, %c0_i32_0 : i32, i32
  }
  func.func @transform_9(%arg0: i32) -> (i32, i32) {
    %c0_i32 = arith.constant 0 : i32
    %c0_i32_0 = arith.constant 0 : i32
    %c0_i32_1 = arith.constant 0 : i32
    return %c0_i32, %c0_i32_0 : i32, i32
  }
  func.func @transform_10(%arg0: i32) -> (i32, i32) {
    %c0_i32 = arith.constant 0 : i32
    %c0_i32_0 = arith.constant 0 : i32
    %c0_i32_1 = arith.constant 0 : i32
    return %c0_i32, %c0_i32_0 : i32, i32
  }
  func.func @transform_11(%arg0: i32) -> (i32, i32) {
    %c0_i32 = arith.constant 0 : i32
    %c0_i32_0 = arith.constant 0 : i32
    %c0_i32_1 = arith.constant 0 : i32
    return %c0_i32, %c0_i32_0 : i32, i32
  }
  func.func @transform_12(%arg0: i32) -> (i32, i32) {
    %c0_i32 = arith.constant 0 : i32
    %c0_i32_0 = arith.constant 0 : i32
    return %arg0, %c0_i32 : i32, i32
  }
  func.func @transform_13(%arg0: i32) -> (i32, i32) {
    %c0_i32 = arith.constant 0 : i32
    %c0_i32_0 = arith.constant 0 : i32
    return %arg0, %c0_i32 : i32, i32
  }
}

</mosaic_0001>

<llo_original>
// kernel: tpu_custom_call.1
$region0: #{tpu_custom_call.1}
  #allocation0 [shape = 'u32[]', space=smem, size = 0x4, offset = 0x4, fixed_abs, tag = 'smem constant byte address 0x4 - core index']
  #allocation1 [shape = 'u32[144,128]{1,0:T(1,128)}', space=vmem, size = 0x12000, scoped, tag = 'internal scratch']
  %s0 = inlined_call_operand.hbm [shape: f32[8,36], index: 0, kind: input, shape index: {}]
  %s1 = inlined_call_operand.vmem [shape: f32[3,12], index: 1, kind: input, shape index: {}]
  %s2 = inlined_call_operand.hbm [shape: f32[36,128], index: 2, kind: input, shape index: {}]
  %s3 = inlined_call_operand.vmem [shape: f32[1,128], index: 3, kind: input, shape index: {}]
  %s4 = inlined_call_operand.vmem [shape: f32[128,128], index: 4, kind: input, shape index: {}]
  %s5 = inlined_call_operand.vmem [shape: f32[1,128], index: 5, kind: input, shape index: {}]
  %s6 = inlined_call_operand.hbm [shape: f32[128,128], index: 6, kind: input, shape index: {}]
  %s7 = inlined_call_operand.vmem [shape: f32[1,128], index: 7, kind: input, shape index: {}]
  %s8 = inlined_call_operand.vmem [shape: f32[128,48], index: 8, kind: input, shape index: {}]
  %s9 = inlined_call_operand.vmem [shape: f32[1,48], index: 9, kind: input, shape index: {}]
  %s10 = inlined_call_operand.vmem [shape: f32[48,128], index: 10, kind: input, shape index: {}]
  %s11 = inlined_call_operand.hbm [shape: f32[36,128], index: 11, kind: input, shape index: {}]
  %s12 = inlined_call_operand.hbm [shape: f32[8,128], index: 12, kind: output, shape index: {0}]
  %s13 = inlined_call_operand.hbm [shape: f32[8,128], index: 13, kind: output, shape index: {1}]
  %14 = xla_tuple %s12, %s13
  %s15 = sld [smem:[#allocation0]]
  $region82: #{tpu_custom_call.1} parent=0
    _
  %s17 = ssub.s32 1, %s15
  %s18 = scalar_select 0, %s17, %s15
  $region1: #{tpu_custom_call.1} parent=0
    #allocation2 [shape = 'u8[4096]{0}', space=vmem, size = 0x1000, scoped, tag = 'input window, operand 0, single buffered']
    #allocation3 [shape = 's32[1]{0}', space=sflag, size = 0x4, scoped, tag = 'scoped memory for tpu_custom_call.1']
    #allocation4 [shape = 's32[1]{0}', space=sflag, size = 0x4, scoped, tag = 'scoped memory for tpu_custom_call.1']
    #allocation5 [shape = 'u8[20480]{0}', space=vmem, size = 0x5000, scoped, tag = 'input window, operand 2, single buffered']
    #allocation6 [shape = 's32[1]{0}', space=sflag, size = 0x4, scoped, tag = 'scoped memory for tpu_custom_call.1']
    #allocation7 [shape = 'u8[65536]{0}', space=vmem, size = 0x10000, scoped, tag = 'input window, operand 6, single buffered']
    #allocation8 [shape = 'u8[20480]{0}', space=vmem, size = 0x5000, scoped, tag = 'input window, operand 11, single buffered']
    #allocation9 [shape = 's32[1]{0}', space=sflag, size = 0x4, scoped, tag = 'scoped memory for tpu_custom_call.1']
    #allocation10 [shape = 'u8[4096]{0}', space=vmem, size = 0x1000, scoped, tag = 'output window, operand 0, single buffered']
    #allocation11 [shape = 'u8[4096]{0}', space=vmem, size = 0x1000, scoped, tag = 'output window, operand 1, single buffered']
    #allocation12 [shape = 's32[1]{0}', space=sflag, size = 0x4, scoped, tag = 'scoped memory for tpu_custom_call.1']
    %19 = vsyncpa [#allocation3], 0
    %20 = vsyncpa [#allocation6], 0
    %21 = vsyncpa [#allocation9], 0
    %22 = vsyncpa [#allocation4], 0
    %23 = vsyncpa [#allocation12], 0
    // Predicated region
    $region2: #{tpu_custom_call.1} parent=1 // pred_check
      _
    $region3: #{tpu_custom_call.1} parent=1 // pred_check_branch
      %25 = sbr.rel (0) target = $region5
    $region4: #{tpu_custom_call.1} parent=1 // pred_region
      %s27 = ssub.s32 128, 128
      %28 = vsyncadd [#allocation3], %s27
      %s30 = sshll.u32 [#allocation2], 4
      %s31 = int_to_ptr.vmem [resolvable:$true] %s30
      %33 = dma.hbm_to_vmem [thread:$0]  %s0, 128, %s31, [#allocation3]
    $region5: #{tpu_custom_call.1} parent=1 // pred_fallthru
      _
    // Predicated region
    $region6: #{tpu_custom_call.1} parent=1 // pred_check
      _
    $region7: #{tpu_custom_call.1} parent=1 // pred_check_branch
      %35 = sbr.rel (0) target = $region9
    $region8: #{tpu_custom_call.1} parent=1 // pred_region
      _
    $region9: #{tpu_custom_call.1} parent=1 // pred_fallthru
      _
    // Predicated region
    $region10: #{tpu_custom_call.1} parent=1 // pred_check
      _
    $region11: #{tpu_custom_call.1} parent=1 // pred_check_branch
      %37 = sbr.rel (0) target = $region13
    $region12: #{tpu_custom_call.1} parent=1 // pred_region
      %s39 = ssub.s32 640, 640
      %40 = vsyncadd [#allocation6], %s39
      %s41 = sshll.u32 [#allocation5], 4
      %s42 = int_to_ptr.vmem [resolvable:$true] %s41
      %47 = dma.hbm_to_vmem [thread:$0]  %s2, 640, %s42, [#allocation6], 128, 128, 8
    $region13: #{tpu_custom_call.1} parent=1 // pred_fallthru
      _
    // Predicated region
    $region14: #{tpu_custom_call.1} parent=1 // pred_check
      _
    $region15: #{tpu_custom_call.1} parent=1 // pred_check_branch
      %49 = sbr.rel (0) target = $region17
    $region16: #{tpu_custom_call.1} parent=1 // pred_region
      _
    $region17: #{tpu_custom_call.1} parent=1 // pred_fallthru
      _
    // Predicated region
    $region18: #{tpu_custom_call.1} parent=1 // pred_check
      _
    $region19: #{tpu_custom_call.1} parent=1 // pred_check_branch
      %51 = sbr.rel (0) target = $region21
    $region20: #{tpu_custom_call.1} parent=1 // pred_region
      _
    $region21: #{tpu_custom_call.1} parent=1 // pred_fallthru
      _
    // Predicated region
    $region22: #{tpu_custom_call.1} parent=1 // pred_check
      _
    $region23: #{tpu_custom_call.1} parent=1 // pred_check_branch
      %53 = sbr.rel (0) target = $region25
    $region24: #{tpu_custom_call.1} parent=1 // pred_region
      _
    $region25: #{tpu_custom_call.1} parent=1 // pred_fallthru
      _
    // Predicated region
    $region26: #{tpu_custom_call.1} parent=1 // pred_check
      _
    $region27: #{tpu_custom_call.1} parent=1 // pred_check_branch
      %55 = sbr.rel (0) target = $region29
    $region28: #{tpu_custom_call.1} parent=1 // pred_region
      %s57 = ssub.s32 2048, 2048
      %58 = vsyncadd [#allocation6], %s57
      %s59 = sshll.u32 [#allocation7], 4
      %s60 = int_to_ptr.vmem [resolvable:$true] %s59
      %65 = dma.hbm_to_vmem [thread:$0]  %s6, 2048, %s60, [#allocation6], 128, 128, 8
    $region29: #{tpu_custom_call.1} parent=1 // pred_fallthru
      _
    // Predicated region
    $region30: #{tpu_custom_call.1} parent=1 // pred_check
      _
    $region31: #{tpu_custom_call.1} parent=1 // pred_check_branch
      %67 = sbr.rel (0) target = $region33
    $region32: #{tpu_custom_call.1} parent=1 // pred_region
      _
    $region33: #{tpu_custom_call.1} parent=1 // pred_fallthru
      _
    // Predicated region
    $region34: #{tpu_custom_call.1} parent=1 // pred_check
      _
    $region35: #{tpu_custom_call.1} parent=1 // pred_check_branch
      %69 = sbr.rel (0) target = $region37
    $region36: #{tpu_custom_call.1} parent=1 // pred_region
      _
    $region37: #{tpu_custom_call.1} parent=1 // pred_fallthru
      _
    // Predicated region
    $region38: #{tpu_custom_call.1} parent=1 // pred_check
      _
    $region39: #{tpu_custom_call.1} parent=1 // pred_check_branch
      %71 = sbr.rel (0) target = $region41
    $region40: #{tpu_custom_call.1} parent=1 // pred_region
      _
    $region41: #{tpu_custom_call.1} parent=1 // pred_fallthru
      _
    // Predicated region
    $region42: #{tpu_custom_call.1} parent=1 // pred_check
      _
    $region43: #{tpu_custom_call.1} parent=1 // pred_check_branch
      %73 = sbr.rel (0) target = $region45
    $region44: #{tpu_custom_call.1} parent=1 // pred_region
      _
    $region45: #{tpu_custom_call.1} parent=1 // pred_fallthru
      _
    // Predicated region
    $region46: #{tpu_custom_call.1} parent=1 // pred_check
      _
    $region47: #{tpu_custom_call.1} parent=1 // pred_check_branch
      %75 = sbr.rel (0) target = $region49
    $region48: #{tpu_custom_call.1} parent=1 // pred_region
      %s77 = ssub.s32 640, 640
      %78 = vsyncadd [#allocation9], %s77
      %s79 = sshll.u32 [#allocation8], 4
      %s80 = int_to_ptr.vmem [resolvable:$true] %s79
      %85 = dma.hbm_to_vmem [thread:$0]  %s11, 640, %s80, [#allocation9], 128, 128, 8
    $region49: #{tpu_custom_call.1} parent=1 // pred_fallthru
      _
    // Predicated region
    $region50: #{tpu_custom_call.1} parent=1 // pred_check
      _
    $region51: #{tpu_custom_call.1} parent=1 // pred_check_branch
      %87 = sbr.rel (0) target = $region53
    $region52: #{tpu_custom_call.1} parent=1 // pred_region
      %88 = dma.done [#allocation3], 128
    $region53: #{tpu_custom_call.1} parent=1 // pred_fallthru
      _
    // Predicated region
    $region54: #{tpu_custom_call.1} parent=1 // pred_check
      _
    $region55: #{tpu_custom_call.1} parent=1 // pred_check_branch
      %90 = sbr.rel (0) target = $region57
    $region56: #{tpu_custom_call.1} parent=1 // pred_region
      %91 = dma.done [#allocation6], 640
    $region57: #{tpu_custom_call.1} parent=1 // pred_fallthru
      _
    // Predicated region
    $region58: #{tpu_custom_call.1} parent=1 // pred_check
      _
    $region59: #{tpu_custom_call.1} parent=1 // pred_check_branch
      %93 = sbr.rel (0) target = $region61
    $region60: #{tpu_custom_call.1} parent=1 // pred_region
      %94 = dma.done [#allocation6], 2048
    $region61: #{tpu_custom_call.1} parent=1 // pred_fallthru
      _
    // Predicated region
    $region62: #{tpu_custom_call.1} parent=1 // pred_check
      _
    $region63: #{tpu_custom_call.1} parent=1 // pred_check_branch
      %96 = sbr.rel (0) target = $region65
    $region64: #{tpu_custom_call.1} parent=1 // pred_region
      %97 = dma.done [#allocation9], 640
    $region65: #{tpu_custom_call.1} parent=1 // pred_fallthru
      _
    %v98 = vld [vmem:[#allocation2] sm:$0xff]
    %v99 = vld [vmem:[#allocation5] sm:$0xff]
    %v100 = vld [vmem:[#allocation5 + $0x8] sm:$0xff]
    %v101 = vld [vmem:[#allocation5 + $0x10] sm:$0xff]
    %v102 = vld [vmem:[#allocation5 + $0x18] sm:$0xff]
    %v103 = vld [vmem:[#allocation5 + $0x20] sm:$0xf]
    %v104 = vld [vmem:[%s3] sm:$0x1]
    %v106 = vlaneseq
    %v107 = vshrl.u32 %v106, 7
    %v108 = vsub.s32 0, %v107
    %v109 = vrot.slane %v104, %v108
    %vm111 = vcmask 293888
    %v113 = vsel %vm111, %v98, 0
    %vm115 = vcmask 1043456
    %v117 = vsel %vm115, %v103, 0
    %119 = vmatprep.subr.mxu0 0.0
    %120 = vmatpush1.msra.mxu0 0.0
    %121 = vmatprep.subr.mxu0 0.0
    %122 = vmatpush1.msra.mxu0 0.0
    %123 = vmatprep.subr.mxu0 0.0
    %124 = vmatpush1.msra.mxu0 0.0
    %125 = vmatprep.subr.mxu0 0.0
    %126 = vmatpush1.msra.mxu0 0.0
    %127 = vmatprep.subr.mxu0 0.0
    %128 = vmatpush1.msra.mxu0 0.0
    %129 = vmatprep.subr.mxu0 0.0
    %130 = vmatpush1.msra.mxu0 0.0
    %131 = vmatprep.subr.mxu0 0.0
    %132 = vmatpush1.msra.mxu0 0.0
    %133 = vmatprep.subr.mxu0 0.0
    %134 = vmatpush1.msra.mxu0 0.0
    %135 = vmatprep.subr.mxu0 0.0
    %136 = vmatpush1.msra.mxu0 0.0
    %137 = vmatprep.subr.mxu0 0.0
    %138 = vmatpush1.msra.mxu0 0.0
    %139 = vmatprep.subr.mxu0 0.0
    %140 = vmatpush1.msra.mxu0 0.0
    %141 = vmatprep.subr.mxu0 0.0
    %142 = vmatpush1.msra.mxu0 %v117
    %143 = vmatprep.subr.mxu0 0.0
    %144 = vmatpush1.msra.mxu0 %v102
    %145 = vmatprep.subr.mxu0 0.0
    %146 = vmatpush1.msra.mxu0 %v101
    %147 = vmatprep.subr.mxu0 0.0
    %148 = vmatpush1.msra.mxu0 %v100
    %149 = vmatprep.subr.mxu0 0.0
    %150 = vmatpush1.msra.mxu0 %v99
    %151 = vmatprep.subr.mxu0 0.0
    %152 = vmatpush2.msra.mxu0 0.0
    %153 = vmatprep.subr.mxu0 0.0
    %154 = vmatpush2.msra.mxu0 0.0
    %155 = vmatprep.subr.mxu0 0.0
    %156 = vmatpush2.msra.mxu0 0.0
    %157 = vmatprep.subr.mxu0 0.0
    %158 = vmatpush2.msra.mxu0 0.0
    %159 = vmatprep.subr.mxu0 0.0
    %160 = vmatpush2.msra.mxu0 0.0
    %161 = vmatprep.subr.mxu0 0.0
    %162 = vmatpush2.msra.mxu0 0.0
    %163 = vmatprep.subr.mxu0 0.0
    %164 = vmatpush2.msra.mxu0 0.0
    %165 = vmatprep.subr.mxu0 0.0
    %166 = vmatpush2.msra.mxu0 0.0
    %167 = vmatprep.subr.mxu0 0.0
    %168 = vmatpush2.msra.mxu0 0.0
    %169 = vmatprep.subr.mxu0 0.0
    %170 = vmatpush2.msra.mxu0 0.0
    %171 = vmatprep.subr.mxu0 0.0
    %172 = vmatpush2.msra.mxu0 0.0
    %173 = vmatprep.subr.mxu0 0.0
    %174 = vmatpush2.msra.mxu0 0.0
    %175 = vmatprep.subr.mxu0 0.0
    %176 = vmatpush2.msra.mxu0 0.0
    %177 = vmatprep.subr.mxu0 0.0
    %178 = vmatpush2.msra.mxu0 0.0
    %179 = vmatprep.subr.mxu0 0.0
    %180 = vmatpush2.msra.mxu0 0.0
    %181 = vmatprep.subr.mxu0 0.0
    %182 = vmatpush2.msra.mxu0 0.0
    %183 = vmatprep.mubr.f32.mxu0 0.0
    %184 = vmatmul.mubr.f32.gmra.mxu0 %v113
    %v185 = vpop.f32.mrf.mxu0
    %v186 = vadd.f32 %v109, %v185
    %v187 = vpop.f32.mrf.mxu0
    %188 = vdwg.mxu0
    %v189 = vmax.f32 %v186, 0.0
    %v190 = vld [vmem:[%s4] sm:$0xff]
    %v191 = vld [vmem:[%s4 + $0x8] sm:$0xff]
    %v192 = vld [vmem:[%s4 + $0x10] sm:$0xff]
    %v193 = vld [vmem:[%s4 + $0x18] sm:$0xff]
    %v194 = vld [vmem:[%s4 + $0x20] sm:$0xff]
    %v195 = vld [vmem:[%s4 + $0x28] sm:$0xff]
    %v196 = vld [vmem:[%s4 + $0x30] sm:$0xff]
    %v197 = vld [vmem:[%s4 + $0x38] sm:$0xff]
    %v198 = vld [vmem:[%s4 + $0x40] sm:$0xff]
    %v199 = vld [vmem:[%s4 + $0x48] sm:$0xff]
    %v200 = vld [vmem:[%s4 + $0x50] sm:$0xff]
    %v201 = vld [vmem:[%s4 + $0x58] sm:$0xff]
    %v202 = vld [vmem:[%s4 + $0x60] sm:$0xff]
    %v203 = vld [vmem:[%s4 + $0x68] sm:$0xff]
    %v204 = vld [vmem:[%s4 + $0x70] sm:$0xff]
    %v205 = vld [vmem:[%s4 + $0x78] sm:$0xff]
    %v206 = vld [vmem:[%s5] sm:$0x1]
    %v208 = vlaneseq
    %v209 = vshrl.u32 %v208, 7
    %v210 = vsub.s32 0, %v209
    %v211 = vrot.slane %v206, %v210
    %213 = vmatprep.subr.mxu0 0.0
    %214 = vmatpush1.msra.mxu0 %v205
    %215 = vmatprep.subr.mxu0 0.0
    %216 = vmatpush1.msra.mxu0 %v204
    %217 = vmatprep.subr.mxu0 0.0
    %218 = vmatpush1.msra.mxu0 %v203
    %219 = vmatprep.subr.mxu0 0.0
    %220 = vmatpush1.msra.mxu0 %v202
    %221 = vmatprep.subr.mxu0 0.0
    %222 = vmatpush1.msra.mxu0 %v201
    %223 = vmatprep.subr.mxu0 0.0
    %224 = vmatpush1.msra.mxu0 %v200
    %225 = vmatprep.subr.mxu0 0.0
    %226 = vmatpush1.msra.mxu0 %v199
    %227 = vmatprep.subr.mxu0 0.0
    %228 = vmatpush1.msra.mxu0 %v198
    %229 = vmatprep.subr.mxu0 0.0
    %230 = vmatpush1.msra.mxu0 %v197
    %231 = vmatprep.subr.mxu0 0.0
    %232 = vmatpush1.msra.mxu0 %v196
    %233 = vmatprep.subr.mxu0 0.0
    %234 = vmatpush1.msra.mxu0 %v195
    %235 = vmatprep.subr.mxu0 0.0
    %236 = vmatpush1.msra.mxu0 %v194
    %237 = vmatprep.subr.mxu0 0.0
    %238 = vmatpush1.msra.mxu0 %v193
    %239 = vmatprep.subr.mxu0 0.0
    %240 = vmatpush1.msra.mxu0 %v192
    %241 = vmatprep.subr.mxu0 0.0
    %242 = vmatpush1.msra.mxu0 %v191
    %243 = vmatprep.subr.mxu0 0.0
    %244 = vmatpush1.msra.mxu0 %v190
    %245 = vmatprep.subr.mxu0 0.0
    %246 = vmatpush2.msra.mxu0 0.0
    %247 = vmatprep.subr.mxu0 0.0
    %248 = vmatpush2.msra.mxu0 0.0
    %249 = vmatprep.subr.mxu0 0.0
    %250 = vmatpush2.msra.mxu0 0.0
    %251 = vmatprep.subr.mxu0 0.0
    %252 = vmatpush2.msra.mxu0 0.0
    %253 = vmatprep.subr.mxu0 0.0
    %254 = vmatpush2.msra.mxu0 0.0
    %255 = vmatprep.subr.mxu0 0.0
    %256 = vmatpush2.msra.mxu0 0.0
    %257 = vmatprep.subr.mxu0 0.0
    %258 = vmatpush2.msra.mxu0 0.0
    %259 = vmatprep.subr.mxu0 0.0
    %260 = vmatpush2.msra.mxu0 0.0
    %261 = vmatprep.subr.mxu0 0.0
    %262 = vmatpush2.msra.mxu0 0.0
    %263 = vmatprep.subr.mxu0 0.0
    %264 = vmatpush2.msra.mxu0 0.0
    %265 = vmatprep.subr.mxu0 0.0
    %266 = vmatpush2.msra.mxu0 0.0
    %267 = vmatprep.subr.mxu0 0.0
    %268 = vmatpush2.msra.mxu0 0.0
    %269 = vmatprep.subr.mxu0 0.0
    %270 = vmatpush2.msra.mxu0 0.0
    %271 = vmatprep.subr.mxu0 0.0
    %272 = vmatpush2.msra.mxu0 0.0
    %273 = vmatprep.subr.mxu0 0.0
    %274 = vmatpush2.msra.mxu0 0.0
    %275 = vmatprep.subr.mxu0 0.0
    %276 = vmatpush2.msra.mxu0 0.0
    %277 = vmatprep.mubr.f32.mxu0 0.0
    %278 = vmatmul.mubr.f32.gmra.mxu0 %v189
    %v279 = vpop.f32.mrf.mxu0
    %v280 = vadd.f32 %v211, %v279
    %v281 = vpop.f32.mrf.mxu0
    %282 = vdwg.mxu0
    %v283 = vmax.f32 %v280, 0.0
    %v284 = vld [vmem:[#allocation7] sm:$0xff]
    %v285 = vld [vmem:[#allocation7 + $0x8] sm:$0xff]
    %v286 = vld [vmem:[#allocation7 + $0x10] sm:$0xff]
    %v287 = vld [vmem:[#allocation7 + $0x18] sm:$0xff]
    %v288 = vld [vmem:[#allocation7 + $0x20] sm:$0xff]
    %v289 = vld [vmem:[#allocation7 + $0x28] sm:$0xff]
    %v290 = vld [vmem:[#allocation7 + $0x30] sm:$0xff]
    %v291 = vld [vmem:[#allocation7 + $0x38] sm:$0xff]
    %v292 = vld [vmem:[#allocation7 + $0x40] sm:$0xff]
    %v293 = vld [vmem:[#allocation7 + $0x48] sm:$0xff]
    %v294 = vld [vmem:[#allocation7 + $0x50] sm:$0xff]
    %v295 = vld [vmem:[#allocation7 + $0x58] sm:$0xff]
    %v296 = vld [vmem:[#allocation7 + $0x60] sm:$0xff]
    %v297 = vld [vmem:[#allocation7 + $0x68] sm:$0xff]
    %v298 = vld [vmem:[#allocation7 + $0x70] sm:$0xff]
    %v299 = vld [vmem:[#allocation7 + $0x78] sm:$0xff]
    %v300 = vld [vmem:[%s7] sm:$0x1]
    %v302 = vlaneseq
    %v303 = vshrl.u32 %v302, 7
    %v304 = vsub.s32 0, %v303
    %v305 = vrot.slane %v300, %v304
    %307 = vmatprep.subr.mxu0 0.0
    %308 = vmatpush1.msra.mxu0 %v299
    %309 = vmatprep.subr.mxu0 0.0
    %310 = vmatpush1.msra.mxu0 %v298
    %311 = vmatprep.subr.mxu0 0.0
    %312 = vmatpush1.msra.mxu0 %v297
    %313 = vmatprep.subr.mxu0 0.0
    %314 = vmatpush1.msra.mxu0 %v296
    %315 = vmatprep.subr.mxu0 0.0
    %316 = vmatpush1.msra.mxu0 %v295
    %317 = vmatprep.subr.mxu0 0.0
    %318 = vmatpush1.msra.mxu0 %v294
    %319 = vmatprep.subr.mxu0 0.0
    %320 = vmatpush1.msra.mxu0 %v293
    %321 = vmatprep.subr.mxu0 0.0
    %322 = vmatpush1.msra.mxu0 %v292
    %323 = vmatprep.subr.mxu0 0.0
    %324 = vmatpush1.msra.mxu0 %v291
    %325 = vmatprep.subr.mxu0 0.0
    %326 = vmatpush1.msra.mxu0 %v290
    %327 = vmatprep.subr.mxu0 0.0
    %328 = vmatpush1.msra.mxu0 %v289
    %329 = vmatprep.subr.mxu0 0.0
    %330 = vmatpush1.msra.mxu0 %v288
    %331 = vmatprep.subr.mxu0 0.0
    %332 = vmatpush1.msra.mxu0 %v287
    %333 = vmatprep.subr.mxu0 0.0
    %334 = vmatpush1.msra.mxu0 %v286
    %335 = vmatprep.subr.mxu0 0.0
    %336 = vmatpush1.msra.mxu0 %v285
    %337 = vmatprep.subr.mxu0 0.0
    %338 = vmatpush1.msra.mxu0 %v284
    %339 = vmatprep.subr.mxu0 0.0
    %340 = vmatpush2.msra.mxu0 0.0
    %341 = vmatprep.subr.mxu0 0.0
    %342 = vmatpush2.msra.mxu0 0.0
    %343 = vmatprep.subr.mxu0 0.0
    %344 = vmatpush2.msra.mxu0 0.0
    %345 = vmatprep.subr.mxu0 0.0
    %346 = vmatpush2.msra.mxu0 0.0
    %347 = vmatprep.subr.mxu0 0.0
    %348 = vmatpush2.msra.mxu0 0.0
    %349 = vmatprep.subr.mxu0 0.0
    %350 = vmatpush2.msra.mxu0 0.0
    %351 = vmatprep.subr.mxu0 0.0
    %352 = vmatpush2.msra.mxu0 0.0
    %353 = vmatprep.subr.mxu0 0.0
    %354 = vmatpush2.msra.mxu0 0.0
    %355 = vmatprep.subr.mxu0 0.0
    %356 = vmatpush2.msra.mxu0 0.0
    %357 = vmatprep.subr.mxu0 0.0
    %358 = vmatpush2.msra.mxu0 0.0
    %359 = vmatprep.subr.mxu0 0.0
    %360 = vmatpush2.msra.mxu0 0.0
    %361 = vmatprep.subr.mxu0 0.0
    %362 = vmatpush2.msra.mxu0 0.0
    %363 = vmatprep.subr.mxu0 0.0
    %364 = vmatpush2.msra.mxu0 0.0
    %365 = vmatprep.subr.mxu0 0.0
    %366 = vmatpush2.msra.mxu0 0.0
    %367 = vmatprep.subr.mxu0 0.0
    %368 = vmatpush2.msra.mxu0 0.0
    %369 = vmatprep.subr.mxu0 0.0
    %370 = vmatpush2.msra.mxu0 0.0
    %371 = vmatprep.mubr.f32.mxu0 0.0
    %372 = vmatmul.mubr.f32.gmra.mxu0 %v283
    %v373 = vpop.f32.mrf.mxu0
    %v374 = vadd.f32 %v305, %v373
    %v375 = vpop.f32.mrf.mxu0
    %376 = vdwg.mxu0
    %v377 = vmax.f32 %v374, 0.0
    %v378 = vld [vmem:[%s8] sm:$0xff]
    %v379 = vld [vmem:[%s8 + $0x8] sm:$0xff]
    %v380 = vld [vmem:[%s8 + $0x10] sm:$0xff]
    %v381 = vld [vmem:[%s8 + $0x18] sm:$0xff]
    %v382 = vld [vmem:[%s8 + $0x20] sm:$0xff]
    %v383 = vld [vmem:[%s8 + $0x28] sm:$0xff]
    %v384 = vld [vmem:[%s8 + $0x30] sm:$0xff]
    %v385 = vld [vmem:[%s8 + $0x38] sm:$0xff]
    %v386 = vld [vmem:[%s8 + $0x40] sm:$0xff]
    %v387 = vld [vmem:[%s8 + $0x48] sm:$0xff]
    %v388 = vld [vmem:[%s8 + $0x50] sm:$0xff]
    %v389 = vld [vmem:[%s8 + $0x58] sm:$0xff]
    %v390 = vld [vmem:[%s8 + $0x60] sm:$0xff]
    %v391 = vld [vmem:[%s8 + $0x68] sm:$0xff]
    %v392 = vld [vmem:[%s8 + $0x70] sm:$0xff]
    %v393 = vld [vmem:[%s8 + $0x78] sm:$0xff]
    %v394 = vld [vmem:[%s9] sm:$0x1]
    %v396 = vlaneseq
    %v397 = vshrl.u32 %v396, 7
    %v398 = vsub.s32 0, %v397
    %v399 = vrot.slane %v394, %v398
    %401 = vmatprep.subr.mxu0 0.0
    %402 = vmatpush1.msra.mxu0 %v393
    %403 = vmatprep.subr.mxu0 0.0
    %404 = vmatpush1.msra.mxu0 %v392
    %405 = vmatprep.subr.mxu0 0.0
    %406 = vmatpush1.msra.mxu0 %v391
    %407 = vmatprep.subr.mxu0 0.0
    %408 = vmatpush1.msra.mxu0 %v390
    %409 = vmatprep.subr.mxu0 0.0
    %410 = vmatpush1.msra.mxu0 %v389
    %411 = vmatprep.subr.mxu0 0.0
    %412 = vmatpush1.msra.mxu0 %v388
    %413 = vmatprep.subr.mxu0 0.0
    %414 = vmatpush1.msra.mxu0 %v387
    %415 = vmatprep.subr.mxu0 0.0
    %416 = vmatpush1.msra.mxu0 %v386
    %417 = vmatprep.subr.mxu0 0.0
    %418 = vmatpush1.msra.mxu0 %v385
    %419 = vmatprep.subr.mxu0 0.0
    %420 = vmatpush1.msra.mxu0 %v384
    %421 = vmatprep.subr.mxu0 0.0
    %422 = vmatpush1.msra.mxu0 %v383
    %423 = vmatprep.subr.mxu0 0.0
    %424 = vmatpush1.msra.mxu0 %v382
    %425 = vmatprep.subr.mxu0 0.0
    %426 = vmatpush1.msra.mxu0 %v381
    %427 = vmatprep.subr.mxu0 0.0
    %428 = vmatpush1.msra.mxu0 %v380
    %429 = vmatprep.subr.mxu0 0.0
    %430 = vmatpush1.msra.mxu0 %v379
    %431 = vmatprep.subr.mxu0 0.0
    %432 = vmatpush1.msra.mxu0 %v378
    %433 = vmatprep.subr.mxu0 0.0
    %434 = vmatpush2.msra.mxu0 0.0
    %435 = vmatprep.subr.mxu0 0.0
    %436 = vmatpush2.msra.mxu0 0.0
    %437 = vmatprep.subr.mxu0 0.0
    %438 = vmatpush2.msra.mxu0 0.0
    %439 = vmatprep.subr.mxu0 0.0
    %440 = vmatpush2.msra.mxu0 0.0
    %441 = vmatprep.subr.mxu0 0.0
    %442 = vmatpush2.msra.mxu0 0.0
    %443 = vmatprep.subr.mxu0 0.0
    %444 = vmatpush2.msra.mxu0 0.0
    %445 = vmatprep.subr.mxu0 0.0
    %446 = vmatpush2.msra.mxu0 0.0
    %447 = vmatprep.subr.mxu0 0.0
    %448 = vmatpush2.msra.mxu0 0.0
    %449 = vmatprep.subr.mxu0 0.0
    %450 = vmatpush2.msra.mxu0 0.0
    %451 = vmatprep.subr.mxu0 0.0
    %452 = vmatpush2.msra.mxu0 0.0
    %453 = vmatprep.subr.mxu0 0.0
    %454 = vmatpush2.msra.mxu0 0.0
    %455 = vmatprep.subr.mxu0 0.0
    %456 = vmatpush2.msra.mxu0 0.0
    %457 = vmatprep.subr.mxu0 0.0
    %458 = vmatpush2.msra.mxu0 0.0
    %459 = vmatprep.subr.mxu0 0.0
    %460 = vmatpush2.msra.mxu0 0.0
    %461 = vmatprep.subr.mxu0 0.0
    %462 = vmatpush2.msra.mxu0 0.0
    %463 = vmatprep.subr.mxu0 0.0
    %464 = vmatpush2.msra.mxu0 0.0
    %465 = vmatprep.mubr.f32.mxu0 0.0
    %466 = vmatmul.mubr.f32.gmra.mxu0 %v377
    %v467 = vpop.f32.mrf.mxu0
    %v468 = vadd.f32 %v399, %v467
    %v469 = vpop.f32.mrf.mxu0
    %470 = vdwg.mxu0
    %v471 = vmul.f32 %v468, %v468
    %473 = vrot.lane.b32.xlu0 %v471, 116
    %v474 = vpop.permute.xlu0 %473
    %v476 = vadd.f32 %v471, %v474
    %477 = vrot.lane.b32.xlu0 %v471, 104
    %v478 = vpop.permute.xlu0 %477
    %v480 = vadd.f32 %v476, %v478
    %481 = vrot.lane.b32.xlu0 %v471, 92
    %v482 = vpop.permute.xlu0 %481
    %v484 = vadd.f32 %v480, %v482
    %v485 = vrsqrt.pop %v484
    %v486 = vmul.f32 %v484, %v485
    %vm487 = vcmp.eq.f32.partialorder %v484, inf
    %v488 = vsel %vm487, %v484, %v486
    %vm489 = vcmp.eq.f32.partialorder %v484, 0.0
    %v490 = vand.u32 %v484, 2147483648
    %v491 = vsel %vm489, %v490, %v488
    %v492 = vadd.f32 %v491, 1e-08
    %v493 = vrcp.pop %v492
    %v494 = vmul.f32 1.0, %v493
    %v495 = vmul.f32 %v468, %v494
    %497 = vrot.lane.b32.xlu0 %v494, 12
    %v498 = vpop.permute.xlu0 %497
    %v500 = vmul.f32 %v468, %v498
    %501 = vrot.lane.b32.xlu0 %v494, 24
    %v502 = vpop.permute.xlu0 %501
    %v504 = vmul.f32 %v468, %v502
    %505 = vrot.lane.b32.xlu0 %v494, 36
    %v506 = vpop.permute.xlu0 %505
    %v508 = vmul.f32 %v468, %v506
    %vm509 = vcmask 97280
    %v510 = vsel %vm509, %v495, %v500
    %vm511 = vcmask 195584
    %v512 = vsel %vm511, %v510, %v504
    %v513 = vsel %vm111, %v512, %v508
    %v514 = vld [vmem:[%s10] sm:$0xff]
    %v515 = vld [vmem:[%s10 + $0x8] sm:$0xff]
    %v516 = vld [vmem:[%s10 + $0x10] sm:$0xff]
    %v517 = vld [vmem:[%s10 + $0x18] sm:$0xff]
    %v518 = vld [vmem:[%s10 + $0x20] sm:$0xff]
    %v519 = vld [vmem:[%s10 + $0x28] sm:$0xff]
    %vm520 = vcmask 392192
    %v522 = vsel %vm520, %v513, 0
    %524 = vmatprep.subr.mxu0 0.0
    %525 = vmatpush1.msra.mxu0 0.0
    %526 = vmatprep.subr.mxu0 0.0
    %527 = vmatpush1.msra.mxu0 0.0
    %528 = vmatprep.subr.mxu0 0.0
    %529 = vmatpush1.msra.mxu0 0.0
    %530 = vmatprep.subr.mxu0 0.0
    %531 = vmatpush1.msra.mxu0 0.0
    %532 = vmatprep.subr.mxu0 0.0
    %533 = vmatpush1.msra.mxu0 0.0
    %534 = vmatprep.subr.mxu0 0.0
    %535 = vmatpush1.msra.mxu0 0.0
    %536 = vmatprep.subr.mxu0 0.0
    %537 = vmatpush1.msra.mxu0 0.0
    %538 = vmatprep.subr.mxu0 0.0
    %539 = vmatpush1.msra.mxu0 0.0
    %540 = vmatprep.subr.mxu0 0.0
    %541 = vmatpush1.msra.mxu0 0.0
    %542 = vmatprep.subr.mxu0 0.0
    %543 = vmatpush1.msra.mxu0 0.0
    %544 = vmatprep.subr.mxu0 0.0
    %545 = vmatpush1.msra.mxu0 %v519
    %546 = vmatprep.subr.mxu0 0.0
    %547 = vmatpush1.msra.mxu0 %v518
    %548 = vmatprep.subr.mxu0 0.0
    %549 = vmatpush1.msra.mxu0 %v517
    %550 = vmatprep.subr.mxu0 0.0
    %551 = vmatpush1.msra.mxu0 %v516
    %552 = vmatprep.subr.mxu0 0.0
    %553 = vmatpush1.msra.mxu0 %v515
    %554 = vmatprep.subr.mxu0 0.0
    %555 = vmatpush1.msra.mxu0 %v514
    %556 = vmatprep.subr.mxu0 0.0
    %557 = vmatpush2.msra.mxu0 0.0
    %558 = vmatprep.subr.mxu0 0.0
    %559 = vmatpush2.msra.mxu0 0.0
    %560 = vmatprep.subr.mxu0 0.0
    %561 = vmatpush2.msra.mxu0 0.0
    %562 = vmatprep.subr.mxu0 0.0
    %563 = vmatpush2.msra.mxu0 0.0
    %564 = vmatprep.subr.mxu0 0.0
    %565 = vmatpush2.msra.mxu0 0.0
    %566 = vmatprep.subr.mxu0 0.0
    %567 = vmatpush2.msra.mxu0 0.0
    %568 = vmatprep.subr.mxu0 0.0
    %569 = vmatpush2.msra.mxu0 0.0
    %570 = vmatprep.subr.mxu0 0.0
    %571 = vmatpush2.msra.mxu0 0.0
    %572 = vmatprep.subr.mxu0 0.0
    %573 = vmatpush2.msra.mxu0 0.0
    %574 = vmatprep.subr.mxu0 0.0
    %575 = vmatpush2.msra.mxu0 0.0
    %576 = vmatprep.subr.mxu0 0.0
    %577 = vmatpush2.msra.mxu0 0.0
    %578 = vmatprep.subr.mxu0 0.0
    %579 = vmatpush2.msra.mxu0 0.0
    %580 = vmatprep.subr.mxu0 0.0
    %581 = vmatpush2.msra.mxu0 0.0
    %582 = vmatprep.subr.mxu0 0.0
    %583 = vmatpush2.msra.mxu0 0.0
    %584 = vmatprep.subr.mxu0 0.0
    %585 = vmatpush2.msra.mxu0 0.0
    %586 = vmatprep.subr.mxu0 0.0
    %587 = vmatpush2.msra.mxu0 0.0
    %588 = vmatprep.mubr.f32.mxu0 0.0
    %589 = vmatmul.mubr.f32.gmra.mxu0 %v522
    %v590 = vpop.f32.mrf.mxu0
    %v591 = vadd.f32 0.0, %v590
    %v592 = vpop.f32.mrf.mxu0
    %593 = vdwg.mxu0
    %594 = vst [vmem:[#allocation11] sm:$0xff] %v591
    %v595 = vld [vmem:[%s1] sm:$0x1]
    %v596 = vld [vmem:[%s1 + $0x1] sm:$0x1]
    %v597 = vld [vmem:[%s1 + $0x2] sm:$0x1]
    %v598 = vmul.f32 %v504, %v504
    %v599 = vmul.f32 %v508, %v508
    %601 = vrot.lane.b32.xlu0 %v599, 116
    %v602 = vpop.permute.xlu0 %601
    %v604 = vadd.f32 %v598, %v602
    %v605 = vmul.f32 %v604, 2.0
    %v606 = vsub.f32 1.0, %v605
    %608 = vrot.lane.b32.xlu0 %v504, 116
    %v609 = vpop.permute.xlu0 %608
    %v611 = vmul.f32 %v500, %v609
    %613 = vrot.lane.b32.xlu0 %v495, 36
    %v614 = vpop.permute.xlu0 %613
    %v616 = vmul.f32 %v508, %v614
    %618 = vrot.lane.b32.xlu0 %v616, 104
    %v619 = vpop.permute.xlu0 %618
    %v621 = vsub.f32 %v611, %v619
    %v622 = vmul.f32 %v621, 2.0
    %624 = vrot.lane.b32.xlu0 %v508, 104
    %v625 = vpop.permute.xlu0 %624
    %v627 = vmul.f32 %v500, %v625
    %628 = vrot.lane.b32.xlu0 %v495, 24
    %v629 = vpop.permute.xlu0 %628
    %v631 = vmul.f32 %v504, %v629
    %633 = vrot.lane.b32.xlu0 %v631, 116
    %v634 = vpop.permute.xlu0 %633
    %v636 = vadd.f32 %v627, %v634
    %v637 = vmul.f32 %v636, 2.0
    %v638 = vadd.f32 %v611, %v619
    %v639 = vmul.f32 %v638, 2.0
    %v640 = vmul.f32 %v500, %v500
    %641 = vrot.lane.b32.xlu0 %v599, 104
    %v642 = vpop.permute.xlu0 %641
    %v644 = vadd.f32 %v640, %v642
    %v645 = vmul.f32 %v644, 2.0
    %v646 = vsub.f32 1.0, %v645
    %647 = vrot.lane.b32.xlu0 %v508, 116
    %v648 = vpop.permute.xlu0 %647
    %v650 = vmul.f32 %v504, %v648
    %651 = vrot.lane.b32.xlu0 %v495, 12
    %v652 = vpop.permute.xlu0 %651
    %v654 = vmul.f32 %v500, %v652
    %656 = vrot.lane.b32.xlu0 %v654, 12
    %v657 = vpop.permute.xlu0 %656
    %v659 = vsub.f32 %v650, %v657
    %v660 = vmul.f32 %v659, 2.0
    %v661 = vsub.f32 %v627, %v634
    %v662 = vmul.f32 %v661, 2.0
    %v663 = vadd.f32 %v650, %v657
    %v664 = vmul.f32 %v663, 2.0
    %666 = vrot.lane.b32.xlu0 %v598, 116
    %v667 = vpop.permute.xlu0 %666
    %v669 = vadd.f32 %v640, %v667
    %v670 = vmul.f32 %v669, 2.0
    %v671 = vsub.f32 1.0, %v670
    %v672 = vlaneseq
    %v673 = vshrl.u32 %v672, 7
    %v674 = vsub.s32 0, %v673
    %v675 = vrot.slane %v595, %v674
    %677 = vrot.lane.b32.xlu0 %v675, 24
    %v678 = vpop.permute.xlu0 %677
    %v680 = vmul.f32 %v606, %v678
    %v681 = vlaneseq
    %v682 = vshrl.u32 %v681, 7
    %v683 = vsub.s32 0, %v682
    %v684 = vrot.slane %v596, %v683
    %686 = vrot.lane.b32.xlu0 %v684, 12
    %v687 = vpop.permute.xlu0 %686
    %v689 = vmul.f32 %v622, %v687
    %691 = vrot.lane.b32.xlu0 %v689, 12
    %v692 = vpop.permute.xlu0 %691
    %v694 = vadd.f32 %v680, %v692
    %v695 = vlaneseq
    %v696 = vshrl.u32 %v695, 7
    %v697 = vsub.s32 0, %v696
    %v698 = vrot.slane %v597, %v697
    %700 = vrot.lane.b32.xlu0 %v698, 12
    %v701 = vpop.permute.xlu0 %700
    %v703 = vmul.f32 %v637, %v701
    %705 = vrot.lane.b32.xlu0 %v703, 12
    %v706 = vpop.permute.xlu0 %705
    %v708 = vadd.f32 %v694, %v706
    %709 = vrot.lane.b32.xlu0 %v675, 12
    %v710 = vpop.permute.xlu0 %709
    %v712 = vmul.f32 %v639, %v710
    %v713 = vmul.f32 %v646, %v687
    %v714 = vadd.f32 %v712, %v713
    %715 = vrot.lane.b32.xlu0 %v698, 24
    %v716 = vpop.permute.xlu0 %715
    %v718 = vmul.f32 %v660, %v716
    %720 = vrot.lane.b32.xlu0 %v718, 116
    %v721 = vpop.permute.xlu0 %720
    %v723 = vadd.f32 %v714, %v721
    %v724 = vmul.f32 %v662, %v710
    %725 = vrot.lane.b32.xlu0 %v684, 24
    %v726 = vpop.permute.xlu0 %725
    %v728 = vmul.f32 %v664, %v726
    %730 = vrot.lane.b32.xlu0 %v728, 116
    %v731 = vpop.permute.xlu0 %730
    %v733 = vadd.f32 %v724, %v731
    %v734 = vmul.f32 %v671, %v701
    %v735 = vadd.f32 %v733, %v734
    %737 = vrot.lane.b32.xlu0 %v708, 104
    %v738 = vpop.permute.xlu0 %737
    %741 = vrot.lane.b32.xlu0 %v735, 12
    %v742 = vpop.permute.xlu0 %741
    %v744 = vsel %vm509, %v738, %v723
    %v745 = vsel %vm511, %v744, %v742
    %v746 = vld [vmem:[#allocation8] sm:$0xff]
    %v747 = vld [vmem:[#allocation8 + $0x8] sm:$0xff]
    %v748 = vld [vmem:[#allocation8 + $0x10] sm:$0xff]
    %v749 = vld [vmem:[#allocation8 + $0x18] sm:$0xff]
    %v750 = vld [vmem:[#allocation8 + $0x20] sm:$0xf]
    %v752 = vsel %vm111, %v745, 0
    %v755 = vsel %vm115, %v750, 0
    %757 = vmatprep.subr.mxu0 0.0
    %758 = vmatpush1.msra.mxu0 0.0
    %759 = vmatprep.subr.mxu0 0.0
    %760 = vmatpush1.msra.mxu0 0.0
    %761 = vmatprep.subr.mxu0 0.0
    %762 = vmatpush1.msra.mxu0 0.0
    %763 = vmatprep.subr.mxu0 0.0
    %764 = vmatpush1.msra.mxu0 0.0
    %765 = vmatprep.subr.mxu0 0.0
    %766 = vmatpush1.msra.mxu0 0.0
    %767 = vmatprep.subr.mxu0 0.0
    %768 = vmatpush1.msra.mxu0 0.0
    %769 = vmatprep.subr.mxu0 0.0
    %770 = vmatpush1.msra.mxu0 0.0
    %771 = vmatprep.subr.mxu0 0.0
    %772 = vmatpush1.msra.mxu0 0.0
    %773 = vmatprep.subr.mxu0 0.0
    %774 = vmatpush1.msra.mxu0 0.0
    %775 = vmatprep.subr.mxu0 0.0
    %776 = vmatpush1.msra.mxu0 0.0
    %777 = vmatprep.subr.mxu0 0.0
    %778 = vmatpush1.msra.mxu0 0.0
    %779 = vmatprep.subr.mxu0 0.0
    %780 = vmatpush1.msra.mxu0 %v755
    %781 = vmatprep.subr.mxu0 0.0
    %782 = vmatpush1.msra.mxu0 %v749
    %783 = vmatprep.subr.mxu0 0.0
    %784 = vmatpush1.msra.mxu0 %v748
    %785 = vmatprep.subr.mxu0 0.0
    %786 = vmatpush1.msra.mxu0 %v747
    %787 = vmatprep.subr.mxu0 0.0
    %788 = vmatpush1.msra.mxu0 %v746
    %789 = vmatprep.subr.mxu0 0.0
    %790 = vmatpush2.msra.mxu0 0.0
    %791 = vmatprep.subr.mxu0 0.0
    %792 = vmatpush2.msra.mxu0 0.0
    %793 = vmatprep.subr.mxu0 0.0
    %794 = vmatpush2.msra.mxu0 0.0
    %795 = vmatprep.subr.mxu0 0.0
    %796 = vmatpush2.msra.mxu0 0.0
    %797 = vmatprep.subr.mxu0 0.0
    %798 = vmatpush2.msra.mxu0 0.0
    %799 = vmatprep.subr.mxu0 0.0
    %800 = vmatpush2.msra.mxu0 0.0
    %801 = vmatprep.subr.mxu0 0.0
    %802 = vmatpush2.msra.mxu0 0.0
    %803 = vmatprep.subr.mxu0 0.0
    %804 = vmatpush2.msra.mxu0 0.0
    %805 = vmatprep.subr.mxu0 0.0
    %806 = vmatpush2.msra.mxu0 0.0
    %807 = vmatprep.subr.mxu0 0.0
    %808 = vmatpush2.msra.mxu0 0.0
    %809 = vmatprep.subr.mxu0 0.0
    %810 = vmatpush2.msra.mxu0 0.0
    %811 = vmatprep.subr.mxu0 0.0
    %812 = vmatpush2.msra.mxu0 0.0
    %813 = vmatprep.subr.mxu0 0.0
    %814 = vmatpush2.msra.mxu0 0.0
    %815 = vmatprep.subr.mxu0 0.0
    %816 = vmatpush2.msra.mxu0 0.0
    %817 = vmatprep.subr.mxu0 0.0
    %818 = vmatpush2.msra.mxu0 0.0
    %819 = vmatprep.subr.mxu0 0.0
    %820 = vmatpush2.msra.mxu0 0.0
    %821 = vmatprep.mubr.f32.mxu0 0.0
    %822 = vmatmul.mubr.f32.gmra.mxu0 %v752
    %v823 = vpop.f32.mrf.mxu0
    %v824 = vadd.f32 0.0, %v823
    %v825 = vpop.f32.mrf.mxu0
    %826 = vdwg.mxu0
    %827 = vst [vmem:[#allocation10] sm:$0xff] %v824
    // Predicated region
    $region66: #{tpu_custom_call.1} parent=1 // pred_check
      _
    $region67: #{tpu_custom_call.1} parent=1 // pred_check_branch
      %829 = sbr.rel (0) target = $region69
    $region68: #{tpu_custom_call.1} parent=1 // pred_region
      %s831 = ssub.s32 128, 128
      %832 = vsyncadd [#allocation4], %s831
      %s834 = sshll.u32 [#allocation10], 4
      %s835 = int_to_ptr.vmem [resolvable:$true] %s834
      %837 = dma.vmem_to_hbm [thread:$0]  %s835, 128, %s12, [#allocation4]
    $region69: #{tpu_custom_call.1} parent=1 // pred_fallthru
      _
    // Predicated region
    $region70: #{tpu_custom_call.1} parent=1 // pred_check
      _
    $region71: #{tpu_custom_call.1} parent=1 // pred_check_branch
      %839 = sbr.rel (0) target = $region73
    $region72: #{tpu_custom_call.1} parent=1 // pred_region
      %s841 = ssub.s32 128, 128
      %842 = vsyncadd [#allocation12], %s841
      %s844 = sshll.u32 [#allocation11], 4
      %s845 = int_to_ptr.vmem [resolvable:$true] %s844
      %847 = dma.vmem_to_hbm [thread:$0]  %s845, 128, %s13, [#allocation12]
    $region73: #{tpu_custom_call.1} parent=1 // pred_fallthru
      _
    // Predicated region
    $region74: #{tpu_custom_call.1} parent=1 // pred_check
      _
    $region75: #{tpu_custom_call.1} parent=1 // pred_check_branch
      %849 = sbr.rel (0) target = $region77
    $region76: #{tpu_custom_call.1} parent=1 // pred_region
      %850 = dma.done [#allocation4], 128
    $region77: #{tpu_custom_call.1} parent=1 // pred_fallthru
      _
    // Predicated region
    $region78: #{tpu_custom_call.1} parent=1 // pred_check
      _
    $region79: #{tpu_custom_call.1} parent=1 // pred_check_branch
      %852 = sbr.rel (0) target = $region81
    $region80: #{tpu_custom_call.1} parent=1 // pred_region
      %853 = dma.done [#allocation12], 128
    $region81: #{tpu_custom_call.1} parent=1 // pred_fallthru
      _
    %854 = vsyncpa [#allocation3], 1
    %855 = vsyncpa [#allocation6], 1
    %856 = vsyncpa [#allocation9], 1
    %857 = vsyncpa [#allocation4], 1
    %858 = vsyncpa [#allocation12], 1

</llo_original>
